<compile_context>
chip_gen: v5e
topology: v5e:2x2
jax: 0.10.0
libtpu: 0.0.40
codegen_flags: <defaults>
</compile_context>

<pallas_src>
import functools

import jax
import jax.numpy as jnp
from jax.experimental import pallas as pl
from jax.experimental.pallas import tpu as pltpu

_LANE = 128   # lane width (last dim, VMEM/vreg)
_SUB = 8      # f32 sublane granularity (second-to-last dim)


def _round_up(x, m):
    return ((x + m - 1) // m) * m


def _mlp_kernel(x_ref, w1_ref, b1_ref, w2_ref, b2_ref, o_ref, *, mxu_dtype):
    # Linear 1 (MXU, f32 accumulation) + bias + ReLU (VPU, f32).
    x = x_ref[...].astype(mxu_dtype)
    h = jnp.dot(x, w1_ref[...].astype(mxu_dtype),
                preferred_element_type=jnp.float32)
    h = jnp.maximum(h + b1_ref[...].astype(jnp.float32), 0.0)
    # Linear 2 (MXU, f32 accumulation) + bias.
    y = jnp.dot(h.astype(mxu_dtype), w2_ref[...].astype(mxu_dtype),
                preferred_element_type=jnp.float32)
    y = y + b2_ref[...].astype(jnp.float32)
    o_ref[...] = y.astype(o_ref.dtype)


def cell_type_embedding(cell_features, w1, b1, w2, b2, *, block_batch=8192,
                        compute_dtype=None, vmem_budget_bytes=48 << 20):
    """Fused forward pass of the CellTypeEmbedding MLP.

    Args:
      cell_features: (batch, input_dim)
      w1: (input_dim, hidden_dim)    b1: (1, hidden_dim)
      w2: (hidden_dim, output_dim)   b2: (1, output_dim)
      block_batch: requested rows per grid step (clamped by VMEM budget).
      compute_dtype: optional MXU operand dtype (e.g. jnp.bfloat16 opt-in).
      vmem_budget_bytes: VMEM footprint budget used to clamp the batch tile
        (48 MiB default leaves headroom on v7x's 64 MiB VMEM).
    Returns:
      (batch, output_dim) array with cell_features.dtype.
    """
    batch, input_dim = cell_features.shape
    hidden_dim = w1.shape[1]
    output_dim = w2.shape[1]
    out_dtype = cell_features.dtype

    # MXU operand dtype: explicit opt-in only.  Default = natural promotion,
    # so f32 activations with bf16 weights still compute in f32 (no silent
    # precision loss); pass compute_dtype=jnp.bfloat16 for the fast path.
    if compute_dtype is None:
        compute_dtype = jnp.promote_types(cell_features.dtype, w1.dtype)

    # Pad ONLY the tiny, VMEM-resident weights: hidden dim -> multiple of 128
    # so the intermediate activation is lane-dense.  Zero padding is exact
    # (padded hidden cols are relu(0+0)=0 and hit zero rows of W2).
    # x / output keep their true narrow widths in HBM (full-array last dims
    # in the BlockSpecs are legal), so no extra streamed HBM traffic.
    hid_p = _round_up(hidden_dim, _LANE)
    w1_p = jnp.pad(w1, ((0, 0), (0, hid_p - hidden_dim)))
    b1_p = jnp.pad(b1, ((0, 0), (0, hid_p - hidden_dim)))
    w2_p = jnp.pad(w2, ((0, hid_p - hidden_dim), (0, 0)))

    x_item = cell_features.dtype.itemsize
    out_item = jnp.dtype(out_dtype).itemsize
    w_item = w1_p.dtype.itemsize

    # ---- VMEM-aware batch-tile sizing ------------------------------------
    # Narrow (tb, 16)/(tb, 24) tiles still occupy tb * 128 lanes in VMEM.
    per_row = (2 * _round_up(input_dim, _LANE) * x_item       # 2x-buffered x tile
               + 2 * _round_up(output_dim, _LANE) * out_item  # 2x-buffered out tile
               + 2 * hid_p * 4)                               # f32 h (+ y slack)
    # Weights counted double-buffered (conservative; they are fetched once).
    weights_vmem = 2 * w_item * (
        _round_up(input_dim, _SUB) * hid_p + _SUB * hid_p
        + hid_p * _round_up(output_dim, _LANE)
        + _SUB * _round_up(output_dim, _LANE))
    headroom = 4 << 20
    tb_max = max(_SUB,
                 ((vmem_budget_bytes - weights_vmem - headroom) // per_row)
                 // _SUB * _SUB)
    tb = min(_round_up(max(block_batch, _SUB), _SUB), tb_max,
             _round_up(batch, _SUB))
    # Keep both v7x TensorCores busy: avoid a 1-step grid when splittable.
    if batch > _SUB and pl.cdiv(batch, tb) == 1:
        tb = _round_up(pl.cdiv(batch, 2), _SUB)
    grid = (pl.cdiv(batch, tb),)

    vmem_limit = min(int(weights_vmem + tb * per_row + headroom), 56 << 20)

    cost = pl.CostEstimate(
        flops=2 * batch * (input_dim * hidden_dim + hidden_dim * output_dim),
        transcendentals=0,
        bytes_accessed=(batch * input_dim * x_item
                        + batch * output_dim * out_item
                        + (w1_p.size + b1_p.size + w2_p.size + b2.size) * w_item),
    )

    kernel = functools.partial(_mlp_kernel, mxu_dtype=compute_dtype)

    return pl.pallas_call(
        kernel,
        out_shape=jax.ShapeDtypeStruct((batch, output_dim), out_dtype),
        grid=grid,
        in_specs=[
            pl.BlockSpec((tb, input_dim), lambda i: (i, 0)),      # streamed x tile
            pl.BlockSpec((input_dim, hid_p), lambda i: (0, 0)),   # resident W1
            pl.BlockSpec((1, hid_p), lambda i: (0, 0)),           # resident b1
            pl.BlockSpec((hid_p, output_dim), lambda i: (0, 0)),  # resident W2
            pl.BlockSpec((1, output_dim), lambda i: (0, 0)),      # resident b2
        ],
        out_specs=pl.BlockSpec((tb, output_dim), lambda i: (i, 0)),
        compiler_params=pltpu.CompilerParams(
            dimension_semantics=("parallel",),
            vmem_limit_bytes=vmem_limit,
        ),
        cost_estimate=cost,
    )(cell_features, w1_p, b1_p, w2_p, b2)


def init_params(key, input_dim, hidden_dim, output_dim):
    """Deterministic init mimicking nn.Linear default (uniform +/- 1/sqrt(fan_in))."""
    k1, k2, k3, k4 = jax.random.split(key, 4)
    lim1 = 1.0 / jnp.sqrt(jnp.float32(input_dim))
    lim2 = 1.0 / jnp.sqrt(jnp.float32(hidden_dim))
    # Stored as (in, out) = PyTorch weight transposed.
    w1 = jax.random.uniform(k1, (input_dim, hidden_dim), jnp.float32, -lim1, lim1)
    b1 = jax.random.uniform(k2, (1, hidden_dim), jnp.float32, -lim1, lim1)
    w2 = jax.random.uniform(k3, (hidden_dim, output_dim), jnp.float32, -lim2, lim2)
    b2 = jax.random.uniform(k4, (1, output_dim), jnp.float32, -lim2, lim2)
    return w1, b1, w2, b2


def _reference(x, w1, b1, w2, b2):
    return jnp.maximum(x @ w1 + b1, 0.0) @ w2 + b2


if __name__ == "__main__":
    # Shapes consistent with the module's forward signature.
    batch, input_dim, hidden_dim, output_dim = 8, 16, 32, 24

    key = jax.random.PRNGKey(0)
    k_x, k_p, k_x2 = jax.random.split(key, 3)
    cell_features = jax.random.normal(k_x, (batch, input_dim), jnp.float32)
    w1, b1, w2, b2 = init_params(k_p, input_dim, hidden_dim, output_dim)

    # Tiny case (single grid step, no padding anywhere).
    out = jax.block_until_ready(cell_type_embedding(cell_features, w1, b1, w2, b2))
    ref = _reference(cell_features, w1, b1, w2, b2)
    assert out.shape == (batch, output_dim)
    assert jnp.allclose(out, ref, atol=1e-5, rtol=1e-5)

    # Default big-tile path on a batch that fits one tile: tile is auto-halved
    # to keep a >=2-step "parallel" grid; last block is clipped (520 rows).
    batch2 = 520
    x2 = jax.random.normal(k_x2, (batch2, input_dim), jnp.float32)
    out2 = jax.block_until_ready(cell_type_embedding(x2, w1, b1, w2, b2))
    ref2 = _reference(x2, w1, b1, w2, b2)
    assert out2.shape == (batch2, output_dim)
    assert jnp.allclose(out2, ref2, atol=1e-5, rtol=1e-5)

    # Explicit small tile: 3-step grid with a clipped final block.
    out3 = jax.block_until_ready(
        cell_type_embedding(x2, w1, b1, w2, b2, block_batch=256))
    assert out3.shape == (batch2, output_dim)
    assert jnp.allclose(out3, ref2, atol=1e-5, rtol=1e-5)

    print("KERNEL_OK")
</pallas_src>

<mosaic_0001>
module attributes {stable_mosaic.version = 11 : i64} {
  func.func @_mlp_kernel(%arg0: i32, %arg1: memref<8x16xf32, #tpu.memory_space<vmem>>, %arg2: memref<16x128xf32, #tpu.memory_space<vmem>>, %arg3: memref<1x128xf32, #tpu.memory_space<vmem>>, %arg4: memref<128x24xf32, #tpu.memory_space<vmem>>, %arg5: memref<1x24xf32, #tpu.memory_space<vmem>>, %arg6: memref<8x24xf32, #tpu.memory_space<vmem>>) attributes {dimension_semantics = [#tpu.dimension_semantics<parallel>], iteration_bounds = array<i64: 1>, scalar_prefetch = 0 : i64, scratch_operands = 0 : i64, tpu.core_type = #tpu.core_type<tc>, window_params = [{transform_indices = @transform_0, window_bounds = array<i64: 8, 16>}, {pipeline_mode = #tpu.pipeline_mode<synchronous>, transform_indices = @transform_1, window_bounds = array<i64: 16, 128>}, {pipeline_mode = #tpu.pipeline_mode<synchronous>, transform_indices = @transform_2, window_bounds = array<i64: 1, 128>}, {pipeline_mode = #tpu.pipeline_mode<synchronous>, transform_indices = @transform_3, window_bounds = array<i64: 128, 24>}, {pipeline_mode = #tpu.pipeline_mode<synchronous>, transform_indices = @transform_4, window_bounds = array<i64: 1, 24>}, {transform_indices = @transform_5, window_bounds = array<i64: 8, 24>}]} {
    %c0 = arith.constant 0 : index
    %c0_0 = arith.constant 0 : index
    %0 = vector.load %arg1[%c0, %c0_0] : memref<8x16xf32, #tpu.memory_space<vmem>>, vector<8x16xf32>
    %c0_1 = arith.constant 0 : index
    %c0_2 = arith.constant 0 : index
    %1 = vector.load %arg2[%c0_1, %c0_2] : memref<16x128xf32, #tpu.memory_space<vmem>>, vector<16x128xf32>
    %cst = arith.constant dense<0.000000e+00> : vector<8x128xf32>
    %2 = tpu.matmul %0, %1, %cst {dimension_numbers = #tpu.dot_dimension_numbers<[1], [0], [0], [1], [0, 0, 1, 1], [], []>} : vector<8x16xf32>, vector<16x128xf32>, vector<8x128xf32> -> vector<8x128xf32>
    %c0_3 = arith.constant 0 : index
    %c0_4 = arith.constant 0 : index
    %3 = vector.load %arg3[%c0_3, %c0_4] : memref<1x128xf32, #tpu.memory_space<vmem>>, vector<1x128xf32>
    %4 = vector.broadcast %3 : vector<1x128xf32> to vector<8x128xf32>
    %5 = arith.addf %2, %4 : vector<8x128xf32>
    %cst_5 = arith.constant 0.000000e+00 : f32
    %6 = vector.broadcast %cst_5 : f32 to vector<8x128xf32>
    %7 = arith.maximumf %5, %6 : vector<8x128xf32>
    %c0_6 = arith.constant 0 : index
    %c0_7 = arith.constant 0 : index
    %8 = vector.load %arg4[%c0_6, %c0_7] : memref<128x24xf32, #tpu.memory_space<vmem>>, vector<128x24xf32>
    %cst_8 = arith.constant dense<0.000000e+00> : vector<8x24xf32>
    %9 = tpu.matmul %7, %8, %cst_8 {dimension_numbers = #tpu.dot_dimension_numbers<[1], [0], [0], [1], [0, 0, 1, 1], [], []>} : vector<8x128xf32>, vector<128x24xf32>, vector<8x24xf32> -> vector<8x24xf32>
    %c0_9 = arith.constant 0 : index
    %c0_10 = arith.constant 0 : index
    %10 = vector.load %arg5[%c0_9, %c0_10] : memref<1x24xf32, #tpu.memory_space<vmem>>, vector<1x24xf32>
    %11 = vector.broadcast %10 : vector<1x24xf32> to vector<8x24xf32>
    %12 = arith.addf %9, %11 : vector<8x24xf32>
    %c0_11 = arith.constant 0 : index
    %c0_12 = arith.constant 0 : index
    %13 = vector.load %arg6[%c0_11, %c0_12] : memref<8x24xf32, #tpu.memory_space<vmem>>, vector<8x24xf32>
    tpu.vector_store %arg6[%c0_11, %c0_12], %12 {strides = array<i32>} : memref<8x24xf32, #tpu.memory_space<vmem>>, vector<8x24xf32>,
    return
  }
  func.func @transform_0(%arg0: i32) -> (i32, i32) {
    %c0_i32 = arith.constant 0 : i32
    %c0_i32_0 = arith.constant 0 : i32
    return %arg0, %c0_i32 : i32, i32
  }
  func.func @transform_1(%arg0: i32) -> (i32, i32) {
    %c0_i32 = arith.constant 0 : i32
    %c0_i32_0 = arith.constant 0 : i32
    %c0_i32_1 = arith.constant 0 : i32
    return %c0_i32, %c0_i32_0 : i32, i32
  }
  func.func @transform_2(%arg0: i32) -> (i32, i32) {
    %c0_i32 = arith.constant 0 : i32
    %c0_i32_0 = arith.constant 0 : i32
    %c0_i32_1 = arith.constant 0 : i32
    return %c0_i32, %c0_i32_0 : i32, i32
  }
  func.func @transform_3(%arg0: i32) -> (i32, i32) {
    %c0_i32 = arith.constant 0 : i32
    %c0_i32_0 = arith.constant 0 : i32
    %c0_i32_1 = arith.constant 0 : i32
    return %c0_i32, %c0_i32_0 : i32, i32
  }
  func.func @transform_4(%arg0: i32) -> (i32, i32) {
    %c0_i32 = arith.constant 0 : i32
    %c0_i32_0 = arith.constant 0 : i32
    %c0_i32_1 = arith.constant 0 : i32
    return %c0_i32, %c0_i32_0 : i32, i32
  }
  func.func @transform_5(%arg0: i32) -> (i32, i32) {
    %c0_i32 = arith.constant 0 : i32
    %c0_i32_0 = arith.constant 0 : i32
    return %arg0, %c0_i32 : i32, i32
  }
}

</mosaic_0001>

<llo_original>
// kernel: tpu_custom_call.1
$region0: #{tpu_custom_call.1}
  #allocation0 [shape = 'u32[]', space=smem, size = 0x4, offset = 0x4, fixed_abs, tag = 'smem constant byte address 0x4 - core index']
  #allocation1 [shape = 'u32[72,128]{1,0:T(1,128)}', space=vmem, size = 0x9000, scoped, tag = 'internal scratch']
  %s0 = inlined_call_operand.vmem [shape: f32[8,16], index: 0, kind: input, shape index: {}]
  %s1 = inlined_call_operand.vmem [shape: f32[16,128], index: 1, kind: input, shape index: {}]
  %s2 = inlined_call_operand.vmem [shape: f32[1,128], index: 2, kind: input, shape index: {}]
  %s3 = inlined_call_operand.vmem [shape: f32[128,24], index: 3, kind: input, shape index: {}]
  %s4 = inlined_call_operand.vmem [shape: f32[1,24], index: 4, kind: input, shape index: {}]
  %s5 = inlined_call_operand.hbm [shape: f32[8,24], index: 5, kind: output, shape index: {}]
  %s6 = sld [smem:[#allocation0]]
  $region30: #{tpu_custom_call.1} parent=0
    _
  %s8 = ssub.s32 1, %s6
  %s9 = scalar_select 0, %s8, %s6
  $region1: #{tpu_custom_call.1} parent=0
    #allocation2 [shape = 'u8[4096]{0}', space=vmem, size = 0x1000, scoped, tag = 'output window, operand 0, single buffered']
    #allocation3 [shape = 's32[1]{0}', space=sflag, size = 0x4, scoped, tag = 'scoped memory for tpu_custom_call.1']
    %10 = vsyncpa [#allocation3], 0
    // Predicated region
    $region2: #{tpu_custom_call.1} parent=1 // pred_check
      _
    $region3: #{tpu_custom_call.1} parent=1 // pred_check_branch
      %12 = sbr.rel (0) target = $region5
    $region4: #{tpu_custom_call.1} parent=1 // pred_region
      _
    $region5: #{tpu_custom_call.1} parent=1 // pred_fallthru
      _
    // Predicated region
    $region6: #{tpu_custom_call.1} parent=1 // pred_check
      _
    $region7: #{tpu_custom_call.1} parent=1 // pred_check_branch
      %14 = sbr.rel (0) target = $region9
    $region8: #{tpu_custom_call.1} parent=1 // pred_region
      _
    $region9: #{tpu_custom_call.1} parent=1 // pred_fallthru
      _
    // Predicated region
    $region10: #{tpu_custom_call.1} parent=1 // pred_check
      _
    $region11: #{tpu_custom_call.1} parent=1 // pred_check_branch
      %16 = sbr.rel (0) target = $region13
    $region12: #{tpu_custom_call.1} parent=1 // pred_region
      _
    $region13: #{tpu_custom_call.1} parent=1 // pred_fallthru
      _
    // Predicated region
    $region14: #{tpu_custom_call.1} parent=1 // pred_check
      _
    $region15: #{tpu_custom_call.1} parent=1 // pred_check_branch
      %18 = sbr.rel (0) target = $region17
    $region16: #{tpu_custom_call.1} parent=1 // pred_region
      _
    $region17: #{tpu_custom_call.1} parent=1 // pred_fallthru
      _
    // Predicated region
    $region18: #{tpu_custom_call.1} parent=1 // pred_check
      _
    $region19: #{tpu_custom_call.1} parent=1 // pred_check_branch
      %20 = sbr.rel (0) target = $region21
    $region20: #{tpu_custom_call.1} parent=1 // pred_region
      _
    $region21: #{tpu_custom_call.1} parent=1 // pred_fallthru
      _
    %v21 = vld [vmem:[%s0] sm:$0xff]
    %v22 = vld [vmem:[%s1] sm:$0xff]
    %v23 = vld [vmem:[%s1 + $0x8] sm:$0xff]
    %v24 = vld [vmem:[%s2] sm:$0x1]
    %v26 = vperm.slane %v24, 0
    %vm28 = vcmask 130048
    %v30 = vsel %vm28, %v21, 0
    %32 = vmatpush.msra.mxu0 0.0
    %33 = vmatpush.msra.mxu0 0.0
    %34 = vmatpush.msra.mxu0 0.0
    %35 = vmatpush.msra.mxu0 0.0
    %36 = vmatpush.msra.mxu0 0.0
    %37 = vmatpush.msra.mxu0 0.0
    %38 = vmatpush.msra.mxu0 0.0
    %39 = vmatpush.msra.mxu0 0.0
    %40 = vmatpush.msra.mxu0 0.0
    %41 = vmatpush.msra.mxu0 0.0
    %42 = vmatpush.msra.mxu0 0.0
    %43 = vmatpush.msra.mxu0 0.0
    %44 = vmatpush.msra.mxu0 0.0
    %45 = vmatpush.msra.mxu0 0.0
    %46 = vmatpush.msra.mxu0 %v23
    %47 = vmatpush.msra.mxu0 %v22
    %48 = vmatmul.f32.gmra.mxu0 %v30
    %v49 = vpop.f32.mrf.mxu0
    %v50 = vadd.f32 %v26, %v49
    %51 = vdwg.mxu0
    %v52 = vmax.f32 %v50, 0.0
    %v53 = vld [vmem:[%s3] sm:$0xff]
    %v54 = vld [vmem:[%s3 + $0x8] sm:$0xff]
    %v55 = vld [vmem:[%s3 + $0x10] sm:$0xff]
    %v56 = vld [vmem:[%s3 + $0x18] sm:$0xff]
    %v57 = vld [vmem:[%s3 + $0x20] sm:$0xff]
    %v58 = vld [vmem:[%s3 + $0x28] sm:$0xff]
    %v59 = vld [vmem:[%s3 + $0x30] sm:$0xff]
    %v60 = vld [vmem:[%s3 + $0x38] sm:$0xff]
    %v61 = vld [vmem:[%s3 + $0x40] sm:$0xff]
    %v62 = vld [vmem:[%s3 + $0x48] sm:$0xff]
    %v63 = vld [vmem:[%s3 + $0x50] sm:$0xff]
    %v64 = vld [vmem:[%s3 + $0x58] sm:$0xff]
    %v65 = vld [vmem:[%s3 + $0x60] sm:$0xff]
    %v66 = vld [vmem:[%s3 + $0x68] sm:$0xff]
    %v67 = vld [vmem:[%s3 + $0x70] sm:$0xff]
    %v68 = vld [vmem:[%s3 + $0x78] sm:$0xff]
    %v69 = vld [vmem:[%s4] sm:$0x1]
    %v71 = vperm.slane %v69, 0
    %73 = vmatpush.msra.mxu0 %v68
    %74 = vmatpush.msra.mxu0 %v67
    %75 = vmatpush.msra.mxu0 %v66
    %76 = vmatpush.msra.mxu0 %v65
    %77 = vmatpush.msra.mxu0 %v64
    %78 = vmatpush.msra.mxu0 %v63
    %79 = vmatpush.msra.mxu0 %v62
    %80 = vmatpush.msra.mxu0 %v61
    %81 = vmatpush.msra.mxu0 %v60
    %82 = vmatpush.msra.mxu0 %v59
    %83 = vmatpush.msra.mxu0 %v58
    %84 = vmatpush.msra.mxu0 %v57
    %85 = vmatpush.msra.mxu0 %v56
    %86 = vmatpush.msra.mxu0 %v55
    %87 = vmatpush.msra.mxu0 %v54
    %88 = vmatpush.msra.mxu0 %v53
    %89 = vmatmul.f32.gmra.mxu0 %v52
    %v90 = vpop.f32.mrf.mxu0
    %v91 = vadd.f32 %v71, %v90
    %92 = vdwg.mxu0
    %vm93 = vcmask 195584
    %94 = vst.msk [vmem:[#allocation2] sm:$0xff] %vm93, %v91
    // Predicated region
    $region22: #{tpu_custom_call.1} parent=1 // pred_check
      _
    $region23: #{tpu_custom_call.1} parent=1 // pred_check_branch
      %96 = sbr.rel (0) target = $region25
    $region24: #{tpu_custom_call.1} parent=1 // pred_region
      %98 = vsyncadd [#allocation3], 0
      %s100 = sshll.u32 [#allocation2], 4
      %s101 = int_to_ptr.vmem [resolvable:$true] %s100
      %s102 = sshll.u32 %s5, 4
      %s103 = int_to_ptr.hbm [resolvable:$true] %s102
      %105 = dma.vmem_to_hbm [thread:$0]  %s101, 128, %s103, [#allocation3]
    $region25: #{tpu_custom_call.1} parent=1 // pred_fallthru
      _
    // Predicated region
    $region26: #{tpu_custom_call.1} parent=1 // pred_check
      _
    $region27: #{tpu_custom_call.1} parent=1 // pred_check_branch
      %107 = sbr.rel (0) target = $region29
    $region28: #{tpu_custom_call.1} parent=1 // pred_region
      %109 = dma.done [#allocation3], 128
    $region29: #{tpu_custom_call.1} parent=1 // pred_fallthru
      _
    %110 = vsyncpa [#allocation3], 1

</llo_original>
